<compile_context>
chip_gen: v7x
topology: tpu7x:2x2x1
jax: 0.10.0
libtpu: 0.0.40
codegen_flags: <defaults>
</compile_context>

<pallas_src>
import functools

import jax
import jax.numpy as jnp
from jax.experimental import pallas as pl
from jax.experimental.pallas import tpu as pltpu


# --------------------------------------------------------------------------------------
# One grid step = one batch element: implicit-GEMM conv on the wide-row grid
# + masked per-channel sum / sum-of-squares for the BN batch statistics.
# --------------------------------------------------------------------------------------
def _conv_stats_kernel(x_ref, w_ref, mask_ref, y_ref, sum_ref, ssq_ref,
                       *, kh, kw, wp, mwp):
    x_full = x_ref[0]                                     # [CinP, LP] (compute dtype)

    # Assemble the KH*KW shifted windows as contiguous (statically offset) lane slices of
    # the flattened padded image and contract them in one MXU matmul (f32 accumulation).
    cols = []
    for i in range(kh):
        for j in range(kw):
            off = i * wp + j                              # static lane offset
            cols.append(x_full[:, off:off + mwp])         # [CinP, MWP]
    patches = jnp.concatenate(cols, axis=0)               # [KH*KW*CinP, MWP]
    acc = jnp.dot(w_ref[...], patches,
                  preferred_element_type=jnp.float32)     # [CP, MWP] f32
    y_ref[0] = acc.astype(y_ref.dtype)

    # BN statistics from the exact f32 accumulator.  Wide-row junk / lane-pad columns are
    # masked to zero; lanes are folded to one 128-wide vreg per stat, so no cross-lane
    # XLU reduction and no narrow store is needed in-kernel.
    ym = acc * mask_ref[...]                              # [CP, MWP]
    cp = ym.shape[0]
    s = jnp.zeros((cp, 128), jnp.float32)
    q = jnp.zeros((cp, 128), jnp.float32)
    for c in range(mwp // 128):                           # static, lane-aligned chunks
        blk = ym[:, c * 128:(c + 1) * 128]
        s = s + blk
        q = q + blk * blk
    sum_ref[0] = s
    ssq_ref[0] = q


def cnr2d(x_nchw, weight_oihw, gamma, beta, kernel_size=4, stride=1, padding=1,
          eps=1e-5, compute_dtype=jnp.bfloat16):
    """CNR2d forward.  x_nchw: [N, Cin, H, W], weight_oihw: [Cout, Cin, KH, KW]."""
    N, Cin, H, W = x_nchw.shape
    Cout = weight_oihw.shape[0]
    KH = KW = kernel_size
    if stride != 1:
        # TODO(synk): wide-row implicit GEMM assumes stride=1 (the CNR2d default).
        raise NotImplementedError("cnr2d Pallas kernel supports stride=1 only")

    HP, WP = H + 2 * padding, W + 2 * padding
    OH, OW = HP - KH + 1, WP - KW + 1

    CP = ((Cout + 7) // 8) * 8                    # sublane-pad output channels
    CinP = ((Cin + 7) // 8) * 8                   # sublane-pad input channels
    K = KH * KW * CinP                            # implicit-GEMM contraction dim
    MW = OH * WP                                  # wide-row output columns per batch elem
    MWP = ((MW + 127) // 128) * 128               # lane-pad output columns
    LP_raw = max(HP * WP, (KH - 1) * WP + (KW - 1) + MWP)
    LP = ((LP_raw + 127) // 128) * 128            # padded flattened image length
    out_dtype = x_nchw.dtype
    cbytes = jnp.dtype(compute_dtype).itemsize

    # ---- cheap wrapper glue (Cin*H*W-sized): cast early, pad channels/spatial, flatten ----
    xq = x_nchw.astype(compute_dtype)
    xp = jnp.pad(xq, ((0, 0), (0, CinP - Cin), (padding, padding), (padding, padding)))
    x_flat = jnp.pad(xp.reshape(N, CinP, HP * WP), ((0, 0), (0, 0), (0, LP - HP * WP)))

    # Weight matrix [CP, K], columns ordered (kh, kw, cin) to match the kernel's patch
    # assembly; padded channels are exact zeros.
    w_mat = jnp.transpose(weight_oihw, (0, 2, 3, 1))            # [Cout, KH, KW, Cin]
    w_mat = jnp.pad(w_mat, ((0, CP - Cout), (0, 0), (0, 0), (0, CinP - Cin)))
    w_mat = w_mat.reshape(CP, K).astype(compute_dtype)

    # Valid-column mask: exclude wide-row junk columns (ow >= OW) and lane padding from
    # the BN statistics.
    col = jnp.arange(MWP)
    mask = ((col < MW) & ((col % WP) < OW)).astype(jnp.float32).reshape(1, MWP)

    # ---- VMEM sizing (v7x has only 64 MiB) ----
    per_step = (2 * (CinP * LP * cbytes)          # image row block (double-buffered)
                + 2 * (CP * MWP * cbytes)         # y block
                + 4 * (CP * 128 * 4)              # stat slabs
                + CP * K * cbytes + MWP * 4       # resident weights + mask
                + K * MWP * cbytes                # in-kernel patch matrix
                + CP * MWP * 4)                   # f32 accumulator
    vmem_limit = int(min(max(4 * per_step, 16 << 20), 64 << 20))
    # TODO(synk): add OH-band tiling when per-step footprint would exceed the VMEM budget.

    flops = 2 * N * CP * K * MWP
    bytes_accessed = (N * CinP * LP * cbytes + CP * K * cbytes + MWP * 4
                      + N * CP * MWP * cbytes + 2 * N * CP * 128 * 4)

    y_wide, sum_slab, ssq_slab = pl.pallas_call(
        functools.partial(_conv_stats_kernel, kh=KH, kw=KW, wp=WP, mwp=MWP),
        out_shape=(
            jax.ShapeDtypeStruct((N, CP, MWP), compute_dtype),   # conv output (wide rows)
            jax.ShapeDtypeStruct((N, CP, 128), jnp.float32),     # per-n lane-folded sum
            jax.ShapeDtypeStruct((N, CP, 128), jnp.float32),     # per-n lane-folded sumsq
        ),
        grid=(N,),
        in_specs=[
            pl.BlockSpec((1, CinP, LP), lambda n: (n, 0, 0)),    # padded image row
            pl.BlockSpec((CP, K), lambda n: (0, 0)),             # weights, resident
            pl.BlockSpec((1, MWP), lambda n: (0, 0)),            # stats mask, resident
        ],
        out_specs=(
            pl.BlockSpec((1, CP, MWP), lambda n: (n, 0, 0)),
            pl.BlockSpec((1, CP, 128), lambda n: (n, 0, 0)),
            pl.BlockSpec((1, CP, 128), lambda n: (n, 0, 0)),
        ),
        compiler_params=pltpu.CompilerParams(
            dimension_semantics=("parallel",),    # per-n blocks only -> megacore-shardable
            vmem_limit_bytes=vmem_limit),
        cost_estimate=pl.CostEstimate(
            flops=int(flops), transcendentals=0, bytes_accessed=int(bytes_accessed)),
    )(x_flat, w_mat, mask)

    # ---- tiny per-channel BN math in f32 (padded channels sliced off before use) ----
    m_real = jnp.float32(N * OH * OW)
    ch_sum = jnp.sum(sum_slab, axis=(0, 2))[:Cout]
    ch_ssq = jnp.sum(ssq_slab, axis=(0, 2))[:Cout]
    mean = ch_sum / m_real
    # One-pass (clamped) variance; fine for conv activations at this scale.
    # TODO(synk): switch to a centered second pass if activations become large/offset.
    var = jnp.maximum(ch_ssq / m_real - mean * mean, 0.0)
    inv_std = jax.lax.rsqrt(var + eps)
    scale = gamma.astype(jnp.float32) * inv_std
    shift = beta.astype(jnp.float32) - mean * scale

    # ---- epilogue: scale/shift/ReLU + layout slice, fused by XLA into one HBM pass.
    # Channels already lead per batch element, so this is a slice+reshape, NOT a transpose.
    y = y_wide[:, :Cout, :MW].reshape(N, Cout, OH, WP)[:, :, :, :OW].astype(jnp.float32)
    out = jnp.maximum(y * scale[None, :, None, None] + shift[None, :, None, None], 0.0)
    return out.astype(out_dtype)


def reference_cnr2d(x, weight, gamma, beta, stride=1, padding=1):
    """Plain-JAX reference (conv -> batchnorm(train) -> relu) for validation."""
    y = jax.lax.conv_general_dilated(
        x, weight, (stride, stride), [(padding, padding), (padding, padding)],
        dimension_numbers=("NCHW", "OIHW", "NCHW"))
    mean = y.mean(axis=(0, 2, 3), keepdims=True)
    var = ((y - mean) ** 2).mean(axis=(0, 2, 3), keepdims=True)
    y_hat = (y - mean) * jax.lax.rsqrt(var + 1e-5)
    y_hat = y_hat * gamma[None, :, None, None] + beta[None, :, None, None]
    return jnp.maximum(y_hat, 0.0)


if __name__ == "__main__":
    key = jax.random.PRNGKey(0)
    k_x, k_w = jax.random.split(key)

    N, Cin, H, W = 2, 4, 16, 16
    Cout, KS, STRIDE, PAD = 8, 4, 1, 1

    x = jax.random.normal(k_x, (N, Cin, H, W), dtype=jnp.float32)
    # Deterministic synthetic parameters (shapes match nn.Conv2d / nn.BatchNorm2d init).
    weight = jax.random.normal(k_w, (Cout, Cin, KS, KS), dtype=jnp.float32) * 0.05
    gamma = jnp.ones((Cout,), dtype=jnp.float32)   # BatchNorm2d.weight init
    beta = jnp.zeros((Cout,), dtype=jnp.float32)   # BatchNorm2d.bias init

    ref = reference_cnr2d(x, weight, gamma, beta, stride=STRIDE, padding=PAD)

    # f32 operand/storage mode: tight tolerance against the f32 reference.
    run_f32 = functools.partial(cnr2d, kernel_size=KS, stride=STRIDE, padding=PAD,
                                compute_dtype=jnp.float32)
    out = jax.block_until_ready(run_f32(x, weight, gamma, beta))
    assert out.shape == (N, Cout, H - 1, W - 1), out.shape
    assert jnp.allclose(out, ref, atol=1e-3, rtol=1e-3), float(jnp.max(jnp.abs(out - ref)))

    # bf16 operands + bf16 y intermediate (default fast path on every TPU generation),
    # f32 MXU accumulation and f32 BN statistics.
    run_bf16 = functools.partial(cnr2d, kernel_size=KS, stride=STRIDE, padding=PAD,
                                 compute_dtype=jnp.bfloat16)
    out_bf16 = jax.block_until_ready(run_bf16(x, weight, gamma, beta))
    assert out_bf16.shape == (N, Cout, H - 1, W - 1), out_bf16.shape
    assert jnp.allclose(out_bf16, ref, atol=4e-2, rtol=4e-2), float(jnp.max(jnp.abs(out_bf16 - ref)))

    print("KERNEL_OK")
</pallas_src>

<mosaic_0001>
module attributes {stable_mosaic.version = 11 : i64} {
  func.func @_conv_stats_kernel(%arg0: i32, %arg1: memref<1x8x512xf32, #tpu.memory_space<vmem>>, %arg2: memref<8x128xf32, #tpu.memory_space<vmem>>, %arg3: memref<1x384xf32, #tpu.memory_space<vmem>>, %arg4: memref<1x8x384xf32, #tpu.memory_space<vmem>>, %arg5: memref<1x8x128xf32, #tpu.memory_space<vmem>>, %arg6: memref<1x8x128xf32, #tpu.memory_space<vmem>>) attributes {dimension_semantics = [#tpu.dimension_semantics<parallel>], iteration_bounds = array<i64: 2>, scalar_prefetch = 0 : i64, scratch_operands = 0 : i64, tpu.core_type = #tpu.core_type<tc>, window_params = [{transform_indices = @transform_0, window_bounds = array<i64: 1, 8, 512>}, {pipeline_mode = #tpu.pipeline_mode<synchronous>, transform_indices = @transform_1, window_bounds = array<i64: 8, 128>}, {pipeline_mode = #tpu.pipeline_mode<synchronous>, transform_indices = @transform_2, window_bounds = array<i64: 1, 384>}, {transform_indices = @transform_3, window_bounds = array<i64: 1, 8, 384>}, {transform_indices = @transform_4, window_bounds = array<i64: 1, 8, 128>}, {transform_indices = @transform_5, window_bounds = array<i64: 1, 8, 128>}]} {
    %c0 = arith.constant 0 : index
    %c0_0 = arith.constant 0 : index
    %c0_1 = arith.constant 0 : index
    %0 = vector.load %arg1[%c0, %c0_0, %c0_1] : memref<1x8x512xf32, #tpu.memory_space<vmem>>, vector<1x8x512xf32>
    %1 = vector.shape_cast %0 : vector<1x8x512xf32> to vector<8x512xf32>
    %2 = vector.extract_strided_slice %1 {offsets = [0, 0], sizes = [8, 384], strides = [1, 1]} : vector<8x512xf32> to vector<8x384xf32>
    %3 = vector.extract_strided_slice %1 {offsets = [0, 1], sizes = [8, 384], strides = [1, 1]} : vector<8x512xf32> to vector<8x384xf32>
    %4 = vector.extract_strided_slice %1 {offsets = [0, 2], sizes = [8, 384], strides = [1, 1]} : vector<8x512xf32> to vector<8x384xf32>
    %5 = vector.extract_strided_slice %1 {offsets = [0, 3], sizes = [8, 384], strides = [1, 1]} : vector<8x512xf32> to vector<8x384xf32>
    %6 = vector.extract_strided_slice %1 {offsets = [0, 18], sizes = [8, 384], strides = [1, 1]} : vector<8x512xf32> to vector<8x384xf32>
    %7 = vector.extract_strided_slice %1 {offsets = [0, 19], sizes = [8, 384], strides = [1, 1]} : vector<8x512xf32> to vector<8x384xf32>
    %8 = vector.extract_strided_slice %1 {offsets = [0, 20], sizes = [8, 384], strides = [1, 1]} : vector<8x512xf32> to vector<8x384xf32>
    %9 = vector.extract_strided_slice %1 {offsets = [0, 21], sizes = [8, 384], strides = [1, 1]} : vector<8x512xf32> to vector<8x384xf32>
    %10 = vector.extract_strided_slice %1 {offsets = [0, 36], sizes = [8, 384], strides = [1, 1]} : vector<8x512xf32> to vector<8x384xf32>
    %11 = vector.extract_strided_slice %1 {offsets = [0, 37], sizes = [8, 384], strides = [1, 1]} : vector<8x512xf32> to vector<8x384xf32>
    %12 = vector.extract_strided_slice %1 {offsets = [0, 38], sizes = [8, 384], strides = [1, 1]} : vector<8x512xf32> to vector<8x384xf32>
    %13 = vector.extract_strided_slice %1 {offsets = [0, 39], sizes = [8, 384], strides = [1, 1]} : vector<8x512xf32> to vector<8x384xf32>
    %14 = vector.extract_strided_slice %1 {offsets = [0, 54], sizes = [8, 384], strides = [1, 1]} : vector<8x512xf32> to vector<8x384xf32>
    %15 = vector.extract_strided_slice %1 {offsets = [0, 55], sizes = [8, 384], strides = [1, 1]} : vector<8x512xf32> to vector<8x384xf32>
    %16 = vector.extract_strided_slice %1 {offsets = [0, 56], sizes = [8, 384], strides = [1, 1]} : vector<8x512xf32> to vector<8x384xf32>
    %17 = vector.extract_strided_slice %1 {offsets = [0, 57], sizes = [8, 384], strides = [1, 1]} : vector<8x512xf32> to vector<8x384xf32>
    %18 = tpu.concatenate %2, %3, %4, %5, %6, %7, %8, %9, %10, %11, %12, %13, %14, %15, %16, %17 in 0 : vector<8x384xf32>, vector<8x384xf32>, vector<8x384xf32>, vector<8x384xf32>, vector<8x384xf32>, vector<8x384xf32>, vector<8x384xf32>, vector<8x384xf32>, vector<8x384xf32>, vector<8x384xf32>, vector<8x384xf32>, vector<8x384xf32>, vector<8x384xf32>, vector<8x384xf32>, vector<8x384xf32>, vector<8x384xf32> -> vector<128x384xf32>
    %c0_2 = arith.constant 0 : index
    %c0_3 = arith.constant 0 : index
    %19 = vector.load %arg2[%c0_2, %c0_3] : memref<8x128xf32, #tpu.memory_space<vmem>>, vector<8x128xf32>
    %cst = arith.constant dense<0.000000e+00> : vector<8x384xf32>
    %20 = tpu.matmul %19, %18, %cst {dimension_numbers = #tpu.dot_dimension_numbers<[1], [0], [0], [1], [0, 0, 1, 1], [], []>} : vector<8x128xf32>, vector<128x384xf32>, vector<8x384xf32> -> vector<8x384xf32>
    %c0_4 = arith.constant 0 : index
    %c0_5 = arith.constant 0 : index
    %c0_6 = arith.constant 0 : index
    %21 = vector.load %arg4[%c0_4, %c0_5, %c0_6] : memref<1x8x384xf32, #tpu.memory_space<vmem>>, vector<1x8x384xf32>
    %22 = vector.shape_cast %21 : vector<1x8x384xf32> to vector<8x384xf32>
    %23 = vector.shape_cast %20 : vector<8x384xf32> to vector<1x8x384xf32>
    tpu.vector_store %arg4[%c0_4, %c0_5, %c0_6], %23 {strides = array<i32>} : memref<1x8x384xf32, #tpu.memory_space<vmem>>, vector<1x8x384xf32>,
    %c0_7 = arith.constant 0 : index
    %c0_8 = arith.constant 0 : index
    %24 = vector.load %arg3[%c0_7, %c0_8] : memref<1x384xf32, #tpu.memory_space<vmem>>, vector<1x384xf32>
    %25 = vector.broadcast %24 : vector<1x384xf32> to vector<8x384xf32>
    %26 = arith.mulf %20, %25 : vector<8x384xf32>
    %cst_9 = arith.constant 0.000000e+00 : f32
    %27 = vector.broadcast %cst_9 : f32 to vector<8x128xf32>
    %cst_10 = arith.constant 0.000000e+00 : f32
    %28 = vector.broadcast %cst_10 : f32 to vector<8x128xf32>
    %29 = vector.extract_strided_slice %26 {offsets = [0, 0], sizes = [8, 128], strides = [1, 1]} : vector<8x384xf32> to vector<8x128xf32>
    %30 = arith.addf %27, %29 : vector<8x128xf32>
    %31 = arith.mulf %29, %29 : vector<8x128xf32>
    %32 = arith.addf %28, %31 : vector<8x128xf32>
    %33 = vector.extract_strided_slice %26 {offsets = [0, 128], sizes = [8, 128], strides = [1, 1]} : vector<8x384xf32> to vector<8x128xf32>
    %34 = arith.addf %30, %33 : vector<8x128xf32>
    %35 = arith.mulf %33, %33 : vector<8x128xf32>
    %36 = arith.addf %32, %35 : vector<8x128xf32>
    %37 = vector.extract_strided_slice %26 {offsets = [0, 256], sizes = [8, 128], strides = [1, 1]} : vector<8x384xf32> to vector<8x128xf32>
    %38 = arith.addf %34, %37 : vector<8x128xf32>
    %39 = arith.mulf %37, %37 : vector<8x128xf32>
    %40 = arith.addf %36, %39 : vector<8x128xf32>
    %c0_11 = arith.constant 0 : index
    %c0_12 = arith.constant 0 : index
    %c0_13 = arith.constant 0 : index
    %41 = vector.load %arg5[%c0_11, %c0_12, %c0_13] : memref<1x8x128xf32, #tpu.memory_space<vmem>>, vector<1x8x128xf32>
    %42 = vector.shape_cast %41 : vector<1x8x128xf32> to vector<8x128xf32>
    %43 = vector.shape_cast %38 : vector<8x128xf32> to vector<1x8x128xf32>
    tpu.vector_store %arg5[%c0_11, %c0_12, %c0_13], %43 {strides = array<i32>} : memref<1x8x128xf32, #tpu.memory_space<vmem>>, vector<1x8x128xf32>,
    %c0_14 = arith.constant 0 : index
    %c0_15 = arith.constant 0 : index
    %c0_16 = arith.constant 0 : index
    %44 = vector.load %arg6[%c0_14, %c0_15, %c0_16] : memref<1x8x128xf32, #tpu.memory_space<vmem>>, vector<1x8x128xf32>
    %45 = vector.shape_cast %44 : vector<1x8x128xf32> to vector<8x128xf32>
    %46 = vector.shape_cast %40 : vector<8x128xf32> to vector<1x8x128xf32>
    tpu.vector_store %arg6[%c0_14, %c0_15, %c0_16], %46 {strides = array<i32>} : memref<1x8x128xf32, #tpu.memory_space<vmem>>, vector<1x8x128xf32>,
    return
  }
  func.func @transform_0(%arg0: i32) -> (i32, i32, i32) {
    %c0_i32 = arith.constant 0 : i32
    %c0_i32_0 = arith.constant 0 : i32
    %c0_i32_1 = arith.constant 0 : i32
    return %arg0, %c0_i32, %c0_i32_0 : i32, i32, i32
  }
  func.func @transform_1(%arg0: i32) -> (i32, i32) {
    %c0_i32 = arith.constant 0 : i32
    %c0_i32_0 = arith.constant 0 : i32
    %c0_i32_1 = arith.constant 0 : i32
    return %c0_i32, %c0_i32_0 : i32, i32
  }
  func.func @transform_2(%arg0: i32) -> (i32, i32) {
    %c0_i32 = arith.constant 0 : i32
    %c0_i32_0 = arith.constant 0 : i32
    %c0_i32_1 = arith.constant 0 : i32
    return %c0_i32, %c0_i32_0 : i32, i32
  }
  func.func @transform_3(%arg0: i32) -> (i32, i32, i32) {
    %c0_i32 = arith.constant 0 : i32
    %c0_i32_0 = arith.constant 0 : i32
    %c0_i32_1 = arith.constant 0 : i32
    return %arg0, %c0_i32, %c0_i32_0 : i32, i32, i32
  }
  func.func @transform_4(%arg0: i32) -> (i32, i32, i32) {
    %c0_i32 = arith.constant 0 : i32
    %c0_i32_0 = arith.constant 0 : i32
    %c0_i32_1 = arith.constant 0 : i32
    return %arg0, %c0_i32, %c0_i32_0 : i32, i32, i32
  }
  func.func @transform_5(%arg0: i32) -> (i32, i32, i32) {
    %c0_i32 = arith.constant 0 : i32
    %c0_i32_0 = arith.constant 0 : i32
    %c0_i32_1 = arith.constant 0 : i32
    return %arg0, %c0_i32, %c0_i32_0 : i32, i32, i32
  }
}

</mosaic_0001>

<llo_original>
// kernel: tpu_custom_call.1
$region0: #{tpu_custom_call.1}
  #allocation0 [shape = 'u32[]', space=smem, size = 0x4, offset = 0x4, fixed_abs, tag = 'smem constant byte address 0x4 - core index']
  #allocation1 [shape = 'u32[144,128]{1,0:T(1,128)}', space=vmem, size = 0x12000, scoped, tag = 'internal scratch']
  %s0 = inlined_call_operand.hbm [shape: f32[2,8,512], index: 0, kind: input, shape index: {}]
  %s1 = inlined_call_operand.hbm [shape: f32[8,128], index: 1, kind: input, shape index: {}]
  %s2 = inlined_call_operand.vmem [shape: f32[1,384], index: 2, kind: input, shape index: {}]
  %s3 = inlined_call_operand.hbm [shape: f32[2,8,384], index: 3, kind: output, shape index: {0}]
  %s4 = inlined_call_operand.hbm [shape: f32[2,8,128], index: 4, kind: output, shape index: {1}]
  %s5 = inlined_call_operand.hbm [shape: f32[2,8,128], index: 5, kind: output, shape index: {2}]
  %6 = xla_tuple %s3, %s4, %s5
  %s7 = sld [smem:[#allocation0]]
  $region69: #{tpu_custom_call.1} parent=0
    _
  %s9 = ssub.s32 1, %s7
  %s10 = scalar_select 0, %s9, %s7
  $region1: #{tpu_custom_call.1} parent=0
    #allocation2 [shape = 'u8[32768]{0}', space=vmem, size = 0x8000, scoped, tag = 'input window, operand 0']
    #allocation3 [shape = 's32[2]{0}', space=sflag, size = 0x8, scoped, tag = 'scoped memory for tpu_custom_call.1']
    #allocation4 [shape = 's32[2]{0}', space=sflag, size = 0x8, scoped, tag = 'scoped memory for tpu_custom_call.1']
    #allocation5 [shape = 'u8[4096]{0}', space=vmem, size = 0x1000, scoped, tag = 'input window, operand 1, single buffered']
    #allocation6 [shape = 's32[1]{0}', space=sflag, size = 0x4, scoped, tag = 'scoped memory for tpu_custom_call.1']
    #allocation7 [shape = 'u8[24576]{0}', space=vmem, size = 0x6000, scoped, tag = 'output window, operand 0']
    #allocation8 [shape = 'u8[8192]{0}', space=vmem, size = 0x2000, scoped, tag = 'output window, operand 1']
    #allocation9 [shape = 's32[2]{0}', space=sflag, size = 0x8, scoped, tag = 'scoped memory for tpu_custom_call.1']
    #allocation10 [shape = 'u8[8192]{0}', space=vmem, size = 0x2000, scoped, tag = 'output window, operand 2']
    %11 = vsyncpa [#allocation3], 0
    %s12 = scalar_lea.sflag [#allocation3], 1
    %13 = vsyncpa %s12, 0
    %14 = vsyncpa [#allocation6], 0
    %15 = vsyncpa [#allocation4], 0
    %s16 = scalar_lea.sflag [#allocation4], 1
    %17 = vsyncpa %s16, 0
    %18 = vsyncpa [#allocation9], 0
    %s19 = scalar_lea.sflag [#allocation9], 1
    %20 = vsyncpa %s19, 0
    loop: start=0, step=1, limit=4
    $region2: #{tpu_custom_call.1} parent=1 // loop_pre_header
      _
    $region3: #{tpu_custom_call.1} parent=1 // loop_header
      %s22 = sphi 0, %s26
      %p23 = scmp.ge.s32.totalorder %s22, 4
      %s32 = sphi 0, %s34
      %s35 = sphi 0, %s32
      %s36 = sphi 0, %s35
      %s52 = sphi 0, %s36
      %s56 = sphi 0, %s56
      %s58 = sphi 0, %s56
      %s59 = sphi 0, %s58
      %s73 = sphi 0, %s59
      %s77 = sphi 0, %s77
      %s79 = sphi 0, %s77
      %s80 = sphi 0, %s79
      %s94 = sphi 0, %s80
      %s100 = sphi 0, %s102
      %s103 = sphi 0, %s100
      %s104 = sphi 0, %s103
      %s120 = sphi 0, %s104
      %s126 = sphi 0, %s128
      %s129 = sphi 0, %s126
      %s130 = sphi 0, %s129
      %s146 = sphi 0, %s130
      %s152 = sphi 0, %s154
      %s155 = sphi 0, %s152
      %s156 = sphi 0, %s155
      %s172 = sphi 0, %s156
    $region4: #{tpu_custom_call.1} parent=1 // loop_header_branch
      %25 = sbr.rel (%p23) target = $region8
    $region5: #{tpu_custom_call.1} parent=1 // loop_body
      %s27 = ssub.s32 %s22, 1
      %s28 = ssub.s32 %s22, 2
      %s29 = sadd.s32 %s22, 1
      %s30 = ssub.s32 %s22, %s29
      %p31 = scmp.eq.s32.totalorder %s30, 0
      %s33 = sadd.s32 %s32, 1
      %s34 = scalar_select %p31, %s32, %s33
      %p37 = pneg %p31
      %p38 = scmp.eq.s32.totalorder %s22, 1
      %p39 = por %p37, %p38
      %p40 = scmp.ne.s32.totalorder %s32, %s35
      %p41 = scmp.eq.s32.totalorder %s22, 0
      %p42 = por %p40, %p41
      %p43 = scmp.ne.s32.totalorder %s32, %s35
      %p44 = scmp.eq.s32.totalorder %s27, 1
      %p45 = por %p43, %p44
      %p46 = scmp.ne.s32.totalorder %s35, %s36
      %p47 = scmp.eq.s32.totalorder %s27, 0
      %p48 = por %p46, %p47
      %p49 = scmp.ne.s32.totalorder %s35, %s36
      %p50 = scmp.eq.s32.totalorder %s28, 1
      %p51 = por %p49, %p50
      %p53 = scmp.ne.s32.totalorder %s36, %s52
      %p54 = scmp.eq.s32.totalorder %s28, 0
      %p55 = por %p53, %p54
      %s57 = sadd.s32 %s56, 1
      %p60 = scmp.eq.s32.totalorder %s22, 1
      %p61 = scmp.ne.s32.totalorder %s56, %s58
      %p62 = scmp.eq.s32.totalorder %s22, 0
      %p63 = por %p61, %p62
      %p64 = scmp.ne.s32.totalorder %s56, %s58
      %p65 = scmp.eq.s32.totalorder %s27, 1
      %p66 = por %p64, %p65
      %p67 = scmp.ne.s32.totalorder %s58, %s59
      %p68 = scmp.eq.s32.totalorder %s27, 0
      %p69 = por %p67, %p68
      %p70 = scmp.ne.s32.totalorder %s58, %s59
      %p71 = scmp.eq.s32.totalorder %s28, 1
      %p72 = por %p70, %p71
      %p74 = scmp.ne.s32.totalorder %s59, %s73
      %p75 = scmp.eq.s32.totalorder %s28, 0
      %p76 = por %p74, %p75
      %s78 = sadd.s32 %s77, 1
      %p81 = scmp.eq.s32.totalorder %s22, 1
      %p82 = scmp.ne.s32.totalorder %s77, %s79
      %p83 = scmp.eq.s32.totalorder %s22, 0
      %p84 = por %p82, %p83
      %p85 = scmp.ne.s32.totalorder %s77, %s79
      %p86 = scmp.eq.s32.totalorder %s27, 1
      %p87 = por %p85, %p86
      %p88 = scmp.ne.s32.totalorder %s79, %s80
      %p89 = scmp.eq.s32.totalorder %s27, 0
      %p90 = por %p88, %p89
      %p91 = scmp.ne.s32.totalorder %s79, %s80
      %p92 = scmp.eq.s32.totalorder %s28, 1
      %p93 = por %p91, %p92
      %p95 = scmp.ne.s32.totalorder %s80, %s94
      %p96 = scmp.eq.s32.totalorder %s28, 0
      %p97 = por %p95, %p96
      %s98 = ssub.s32 %s22, %s29
      %p99 = scmp.eq.s32.totalorder %s98, 0
      %s101 = sadd.s32 %s100, 1
      %s102 = scalar_select %p99, %s100, %s101
      %p105 = pneg %p99
      %p106 = scmp.eq.s32.totalorder %s22, 1
      %p107 = por %p105, %p106
      %p108 = scmp.ne.s32.totalorder %s100, %s103
      %p109 = scmp.eq.s32.totalorder %s22, 0
      %p110 = por %p108, %p109
      %p111 = scmp.ne.s32.totalorder %s100, %s103
      %p112 = scmp.eq.s32.totalorder %s27, 1
      %p113 = por %p111, %p112
      %p114 = scmp.ne.s32.totalorder %s103, %s104
      %p115 = scmp.eq.s32.totalorder %s27, 0
      %p116 = por %p114, %p115
      %p117 = scmp.ne.s32.totalorder %s103, %s104
      %p118 = scmp.eq.s32.totalorder %s28, 1
      %p119 = por %p117, %p118
      %p121 = scmp.ne.s32.totalorder %s104, %s120
      %p122 = scmp.eq.s32.totalorder %s28, 0
      %p123 = por %p121, %p122
      %s124 = ssub.s32 %s22, %s29
      %p125 = scmp.eq.s32.totalorder %s124, 0
      %s127 = sadd.s32 %s126, 1
      %s128 = scalar_select %p125, %s126, %s127
      %p131 = pneg %p125
      %p132 = scmp.eq.s32.totalorder %s22, 1
      %p133 = por %p131, %p132
      %p134 = scmp.ne.s32.totalorder %s126, %s129
      %p135 = scmp.eq.s32.totalorder %s22, 0
      %p136 = por %p134, %p135
      %p137 = scmp.ne.s32.totalorder %s126, %s129
      %p138 = scmp.eq.s32.totalorder %s27, 1
      %p139 = por %p137, %p138
      %p140 = scmp.ne.s32.totalorder %s129, %s130
      %p141 = scmp.eq.s32.totalorder %s27, 0
      %p142 = por %p140, %p141
      %p143 = scmp.ne.s32.totalorder %s129, %s130
      %p144 = scmp.eq.s32.totalorder %s28, 1
      %p145 = por %p143, %p144
      %p147 = scmp.ne.s32.totalorder %s130, %s146
      %p148 = scmp.eq.s32.totalorder %s28, 0
      %p149 = por %p147, %p148
      %s150 = ssub.s32 %s22, %s29
      %p151 = scmp.eq.s32.totalorder %s150, 0
      %s153 = sadd.s32 %s152, 1
      %s154 = scalar_select %p151, %s152, %s153
      %p157 = pneg %p151
      %p158 = scmp.eq.s32.totalorder %s22, 1
      %p159 = por %p157, %p158
      %p160 = scmp.ne.s32.totalorder %s152, %s155
      %p161 = scmp.eq.s32.totalorder %s22, 0
      %p162 = por %p160, %p161
      %p163 = scmp.ne.s32.totalorder %s152, %s155
      %p164 = scmp.eq.s32.totalorder %s27, 1
      %p165 = por %p163, %p164
      %p166 = scmp.ne.s32.totalorder %s155, %s156
      %p167 = scmp.eq.s32.totalorder %s27, 0
      %p168 = por %p166, %p167
      %p169 = scmp.ne.s32.totalorder %s155, %s156
      %p170 = scmp.eq.s32.totalorder %s28, 1
      %p171 = por %p169, %p170
      %p173 = scmp.ne.s32.totalorder %s156, %s172
      %p174 = scmp.eq.s32.totalorder %s28, 0
      %p175 = por %p173, %p174
      %p176 = scmp.le.s32.totalorder 1, %s22
      %p177 = scmp.lt.s32.totalorder %s22, 3
      %p178 = pnand %p176, %p177
      %p179 = pneg %p178
      // Predicated region
      $region9: #{tpu_custom_call.1} parent=5 // pred_check
        _
      $region10: #{tpu_custom_call.1} parent=5 // pred_check_branch
        %181 = sbr.rel (%p178) target = $region12
      $region11: #{tpu_custom_call.1} parent=5 // pred_region
        %s182 = ssub.s32 %s22, 1
        // Predicated region
        $region13: #{tpu_custom_call.1} parent=11 // pred_check
          %p183 = pneg %p69
        $region14: #{tpu_custom_call.1} parent=11 // pred_check_branch
          %185 = sbr.rel (%p183) target = $region16
        $region15: #{tpu_custom_call.1} parent=11 // pred_region
          %s187 = ssub.s32 128, 128
          %188 = vsyncadd [#allocation6], %s187
          %s190 = sshll.u32 [#allocation5], 4
          %s191 = int_to_ptr.vmem [resolvable:$true] %s190
          %193 = dma.hbm_to_vmem [thread:$0]  %s1, 128, %s191, [#allocation6]
        $region16: #{tpu_custom_call.1} parent=11 // pred_fallthru
          _
        // Predicated region
        $region17: #{tpu_custom_call.1} parent=11 // pred_check
          %p194 = pneg %p90
        $region18: #{tpu_custom_call.1} parent=11 // pred_check_branch
          %196 = sbr.rel (%p194) target = $region20
        $region19: #{tpu_custom_call.1} parent=11 // pred_region
          _
        $region20: #{tpu_custom_call.1} parent=11 // pred_fallthru
          _
      $region12: #{tpu_custom_call.1} parent=5 // pred_fallthru
        _
      %p197 = scmp.lt.s32.totalorder %s22, 2
      // Predicated region
      $region21: #{tpu_custom_call.1} parent=5 // pred_check
        %p198 = pneg %p197
      $region22: #{tpu_custom_call.1} parent=5 // pred_check_branch
        %200 = sbr.rel (%p198) target = $region24
      $region23: #{tpu_custom_call.1} parent=5 // pred_region
        // Predicated region
        $region25: #{tpu_custom_call.1} parent=23 // pred_check
          %p201 = pneg %p42
        $region26: #{tpu_custom_call.1} parent=23 // pred_check_branch
          %203 = sbr.rel (%p201) target = $region28
        $region27: #{tpu_custom_call.1} parent=23 // pred_region
          %s204 = sand.u32 %s32, 1
          %s205 = scalar_lea.sflag [#allocation3], %s204
          %s206 = sand.u32 %s32, 1
          %s207 = smul.addr %s206, 32
          %s208 = scalar_lea.vmem [#allocation2], %s207
          %s210 = ssub.s32 512, 512
          %211 = vsyncadd %s205, %s210
          %s212 = smul.addr %s22, 4
          %s213 = smul.addr %s212, 128
          %s214 = scalar_lea.hbm %s0, %s213
          %s216 = sshll.u32 %s208, 4
          %s217 = int_to_ptr.vmem [resolvable:$true] %s216
          %219 = dma.hbm_to_vmem [thread:$0]  %s214, 512, %s217, %s205
        $region28: #{tpu_custom_call.1} parent=23 // pred_fallthru
          _
      $region24: #{tpu_custom_call.1} parent=5 // pred_fallthru
        _
      %p220 = scmp.le.s32.totalorder 1, %s22
      %p221 = scmp.lt.s32.totalorder %s22, 3
      %p222 = pnand %p220, %p221
      %p223 = pneg %p222
      // Predicated region
      $region29: #{tpu_custom_call.1} parent=5 // pred_check
        _
      $region30: #{tpu_custom_call.1} parent=5 // pred_check_branch
        %225 = sbr.rel (%p222) target = $region32
      $region31: #{tpu_custom_call.1} parent=5 // pred_region
        %s226 = ssub.s32 %s22, 1
        %s227 = sand.u32 %s35, 1
        %s228 = scalar_lea.sflag [#allocation3], %s227
        %s229 = sand.u32 %s35, 1
        %s230 = smul.addr %s229, 32
        %s231 = scalar_lea.vmem [#allocation2], %s230
        // Predicated region
        $region33: #{tpu_custom_call.1} parent=31 // pred_check
          %p232 = pneg %p48
        $region34: #{tpu_custom_call.1} parent=31 // pred_check_branch
          %234 = sbr.rel (%p232) target = $region36
        $region35: #{tpu_custom_call.1} parent=31 // pred_region
          %235 = dma.done %s228, 512
        $region36: #{tpu_custom_call.1} parent=31 // pred_fallthru
          _
        // Predicated region
        $region37: #{tpu_custom_call.1} parent=31 // pred_check
          %p236 = pneg %p69
        $region38: #{tpu_custom_call.1} parent=31 // pred_check_branch
          %238 = sbr.rel (%p236) target = $region40
        $region39: #{tpu_custom_call.1} parent=31 // pred_region
          %239 = dma.done [#allocation6], 128
        $region40: #{tpu_custom_call.1} parent=31 // pred_fallthru
          _
        %s240 = sand.u32 %s35, 1
        %s241 = scalar_lea.sflag [#allocation3], %s240
        %s242 = sand.u32 %s35, 1
        %s243 = smul.addr %s242, 32
        %s244 = scalar_lea.vmem [#allocation2], %s243
        %p245 = pneg %p48
        %p246 = pneg %p45
        %p247 = pneg %p69
        %p248 = pneg %p66
        %p249 = pneg %p90
        %p250 = pneg %p87
        %p251 = pneg %p116
        %p252 = pneg %p113
        %s253 = sand.u32 %s103, 1
        %s254 = scalar_lea.sflag [#allocation4], %s253
        %s255 = sand.u32 %s103, 1
        %s256 = smul.addr %s255, 24
        %s257 = scalar_lea.vmem [#allocation7], %s256
        %p258 = pneg %p142
        %p259 = pneg %p139
        %s260 = sand.u32 %s27, 1
        %s261 = scalar_lea.sflag [#allocation9], %s260
        %s262 = sand.u32 %s129, 1
        %s263 = smul.addr %s262, 8
        %s264 = scalar_lea.vmem [#allocation8], %s263
        %p265 = pneg %p168
        %p266 = pneg %p165
        %s267 = sand.u32 %s27, 1
        %s268 = scalar_lea.sflag [#allocation9], %s267
        %s269 = sand.u32 %s155, 1
        %s270 = smul.addr %s269, 8
        %s271 = scalar_lea.vmem [#allocation10], %s270
        %v272 = vld [vmem:[%s231] sm:$0xff]
        %v273 = vld [vmem:[%s231 + $0x8] sm:$0xff]
        %v274 = vld [vmem:[%s231 + $0x10] sm:$0xff]
        %v275 = vld [vmem:[%s231 + $0x18] sm:$0xff]
        %280 = vrot.lane.b32.xlu0 %v272, 127
        %v281 = vpop.permute.xlu0 %280
        %282 = vrot.lane.b32.xlu0 %v273, 127
        %v283 = vpop.permute.xlu0 %282
        %284 = vrot.lane.b32.xlu0 %v274, 127
        %v285 = vpop.permute.xlu0 %284
        %286 = vrot.lane.b32.xlu0 %v275, 127
        %v287 = vpop.permute.xlu0 %286
        %vm288 = vcmask 1039360
        %v289 = vsel %vm288, %v281, %v283
        %v290 = vsel %vm288, %v283, %v285
        %v291 = vsel %vm288, %v285, %v287
        %295 = vrot.lane.b32.xlu0 %v272, 126
        %v296 = vpop.permute.xlu0 %295
        %297 = vrot.lane.b32.xlu0 %v273, 126
        %v298 = vpop.permute.xlu0 %297
        %299 = vrot.lane.b32.xlu0 %v274, 126
        %v300 = vpop.permute.xlu0 %299
        %301 = vrot.lane.b32.xlu0 %v275, 126
        %v302 = vpop.permute.xlu0 %301
        %vm303 = vcmask 1031168
        %v304 = vsel %vm303, %v296, %v298
        %v305 = vsel %vm303, %v298, %v300
        %v306 = vsel %vm303, %v300, %v302
        %310 = vrot.lane.b32.xlu0 %v272, 125
        %v311 = vpop.permute.xlu0 %310
        %312 = vrot.lane.b32.xlu0 %v273, 125
        %v313 = vpop.permute.xlu0 %312
        %314 = vrot.lane.b32.xlu0 %v274, 125
        %v315 = vpop.permute.xlu0 %314
        %316 = vrot.lane.b32.xlu0 %v275, 125
        %v317 = vpop.permute.xlu0 %316
        %vm318 = vcmask 1022976
        %v319 = vsel %vm318, %v311, %v313
        %v320 = vsel %vm318, %v313, %v315
        %v321 = vsel %vm318, %v315, %v317
        %325 = vrot.lane.b32.xlu0 %v272, 110
        %v326 = vpop.permute.xlu0 %325
        %327 = vrot.lane.b32.xlu0 %v273, 110
        %v328 = vpop.permute.xlu0 %327
        %329 = vrot.lane.b32.xlu0 %v274, 110
        %v330 = vpop.permute.xlu0 %329
        %331 = vrot.lane.b32.xlu0 %v275, 110
        %v332 = vpop.permute.xlu0 %331
        %vm333 = vcmask 900096
        %v334 = vsel %vm333, %v326, %v328
        %v335 = vsel %vm333, %v328, %v330
        %v336 = vsel %vm333, %v330, %v332
        %340 = vrot.lane.b32.xlu0 %v272, 109
        %v341 = vpop.permute.xlu0 %340
        %342 = vrot.lane.b32.xlu0 %v273, 109
        %v343 = vpop.permute.xlu0 %342
        %344 = vrot.lane.b32.xlu0 %v274, 109
        %v345 = vpop.permute.xlu0 %344
        %346 = vrot.lane.b32.xlu0 %v275, 109
        %v347 = vpop.permute.xlu0 %346
        %vm348 = vcmask 891904
        %v349 = vsel %vm348, %v341, %v343
        %v350 = vsel %vm348, %v343, %v345
        %v351 = vsel %vm348, %v345, %v347
        %355 = vrot.lane.b32.xlu0 %v272, 108
        %v356 = vpop.permute.xlu0 %355
        %357 = vrot.lane.b32.xlu0 %v273, 108
        %v358 = vpop.permute.xlu0 %357
        %359 = vrot.lane.b32.xlu0 %v274, 108
        %v360 = vpop.permute.xlu0 %359
        %361 = vrot.lane.b32.xlu0 %v275, 108
        %v362 = vpop.permute.xlu0 %361
        %vm363 = vcmask 883712
        %v364 = vsel %vm363, %v356, %v358
        %v365 = vsel %vm363, %v358, %v360
        %v366 = vsel %vm363, %v360, %v362
        %370 = vrot.lane.b32.xlu0 %v272, 107
        %v371 = vpop.permute.xlu0 %370
        %372 = vrot.lane.b32.xlu0 %v273, 107
        %v373 = vpop.permute.xlu0 %372
        %374 = vrot.lane.b32.xlu0 %v274, 107
        %v375 = vpop.permute.xlu0 %374
        %376 = vrot.lane.b32.xlu0 %v275, 107
        %v377 = vpop.permute.xlu0 %376
        %vm378 = vcmask 875520
        %v379 = vsel %vm378, %v371, %v373
        %v380 = vsel %vm378, %v373, %v375
        %v381 = vsel %vm378, %v375, %v377
        %385 = vrot.lane.b32.xlu0 %v272, 92
        %v386 = vpop.permute.xlu0 %385
        %387 = vrot.lane.b32.xlu0 %v273, 92
        %v388 = vpop.permute.xlu0 %387
        %389 = vrot.lane.b32.xlu0 %v274, 92
        %v390 = vpop.permute.xlu0 %389
        %391 = vrot.lane.b32.xlu0 %v275, 92
        %v392 = vpop.permute.xlu0 %391
        %vm393 = vcmask 752640
        %v394 = vsel %vm393, %v386, %v388
        %v395 = vsel %vm393, %v388, %v390
        %v396 = vsel %vm393, %v390, %v392
        %400 = vrot.lane.b32.xlu0 %v272, 91
        %v401 = vpop.permute.xlu0 %400
        %402 = vrot.lane.b32.xlu0 %v273, 91
        %v403 = vpop.permute.xlu0 %402
        %404 = vrot.lane.b32.xlu0 %v274, 91
        %v405 = vpop.permute.xlu0 %404
        %406 = vrot.lane.b32.xlu0 %v275, 91
        %v407 = vpop.permute.xlu0 %406
        %vm408 = vcmask 744448
        %v409 = vsel %vm408, %v401, %v403
        %v410 = vsel %vm408, %v403, %v405
        %v411 = vsel %vm408, %v405, %v407
        %415 = vrot.lane.b32.xlu0 %v272, 90
        %v416 = vpop.permute.xlu0 %415
        %417 = vrot.lane.b32.xlu0 %v273, 90
        %v418 = vpop.permute.xlu0 %417
        %419 = vrot.lane.b32.xlu0 %v274, 90
        %v420 = vpop.permute.xlu0 %419
        %421 = vrot.lane.b32.xlu0 %v275, 90
        %v422 = vpop.permute.xlu0 %421
        %vm423 = vcmask 736256
        %v424 = vsel %vm423, %v416, %v418
        %v425 = vsel %vm423, %v418, %v420
        %v426 = vsel %vm423, %v420, %v422
        %430 = vrot.lane.b32.xlu0 %v272, 89
        %v431 = vpop.permute.xlu0 %430
        %432 = vrot.lane.b32.xlu0 %v273, 89
        %v433 = vpop.permute.xlu0 %432
        %434 = vrot.lane.b32.xlu0 %v274, 89
        %v435 = vpop.permute.xlu0 %434
        %436 = vrot.lane.b32.xlu0 %v275, 89
        %v437 = vpop.permute.xlu0 %436
        %vm438 = vcmask 728064
        %v439 = vsel %vm438, %v431, %v433
        %v440 = vsel %vm438, %v433, %v435
        %v441 = vsel %vm438, %v435, %v437
        %445 = vrot.lane.b32.xlu0 %v272, 74
        %v446 = vpop.permute.xlu0 %445
        %447 = vrot.lane.b32.xlu0 %v273, 74
        %v448 = vpop.permute.xlu0 %447
        %449 = vrot.lane.b32.xlu0 %v274, 74
        %v450 = vpop.permute.xlu0 %449
        %451 = vrot.lane.b32.xlu0 %v275, 74
        %v452 = vpop.permute.xlu0 %451
        %vm453 = vcmask 605184
        %v454 = vsel %vm453, %v446, %v448
        %v455 = vsel %vm453, %v448, %v450
        %v456 = vsel %vm453, %v450, %v452
        %460 = vrot.lane.b32.xlu0 %v272, 73
        %v461 = vpop.permute.xlu0 %460
        %462 = vrot.lane.b32.xlu0 %v273, 73
        %v463 = vpop.permute.xlu0 %462
        %464 = vrot.lane.b32.xlu0 %v274, 73
        %v465 = vpop.permute.xlu0 %464
        %466 = vrot.lane.b32.xlu0 %v275, 73
        %v467 = vpop.permute.xlu0 %466
        %vm468 = vcmask 596992
        %v469 = vsel %vm468, %v461, %v463
        %v470 = vsel %vm468, %v463, %v465
        %v471 = vsel %vm468, %v465, %v467
        %475 = vrot.lane.b32.xlu0 %v272, 72
        %v476 = vpop.permute.xlu0 %475
        %477 = vrot.lane.b32.xlu0 %v273, 72
        %v478 = vpop.permute.xlu0 %477
        %479 = vrot.lane.b32.xlu0 %v274, 72
        %v480 = vpop.permute.xlu0 %479
        %481 = vrot.lane.b32.xlu0 %v275, 72
        %v482 = vpop.permute.xlu0 %481
        %vm483 = vcmask 588800
        %v484 = vsel %vm483, %v476, %v478
        %v485 = vsel %vm483, %v478, %v480
        %v486 = vsel %vm483, %v480, %v482
        %490 = vrot.lane.b32.xlu0 %v272, 71
        %v491 = vpop.permute.xlu0 %490
        %492 = vrot.lane.b32.xlu0 %v273, 71
        %v493 = vpop.permute.xlu0 %492
        %494 = vrot.lane.b32.xlu0 %v274, 71
        %v495 = vpop.permute.xlu0 %494
        %496 = vrot.lane.b32.xlu0 %v275, 71
        %v497 = vpop.permute.xlu0 %496
        %vm498 = vcmask 580608
        %v499 = vsel %vm498, %v491, %v493
        %v500 = vsel %vm498, %v493, %v495
        %v501 = vsel %vm498, %v495, %v497
        %v505 = vld [vmem:[#allocation5] sm:$0xff]
        %506 = vmatprep.subr.mxu0 %v273
        %507 = vmatpush1.msra.mxu0 %v272
        %508 = vmatprep.subr.mxu0 %v290
        %509 = vmatpush1.msra.mxu0 %v289
        %510 = vmatprep.subr.mxu0 %v305
        %511 = vmatpush1.msra.mxu0 %v304
        %512 = vmatprep.subr.mxu0 %v320
        %513 = vmatpush1.msra.mxu0 %v319
        %514 = vmatprep.subr.mxu0 %v335
        %515 = vmatpush1.msra.mxu0 %v334
        %516 = vmatprep.subr.mxu0 %v350
        %517 = vmatpush1.msra.mxu0 %v349
        %518 = vmatprep.subr.mxu0 %v365
        %519 = vmatpush1.msra.mxu0 %v364
        %520 = vmatprep.subr.mxu0 %v380
        %521 = vmatpush1.msra.mxu0 %v379
        %522 = vmatprep.subr.mxu0 %v395
        %523 = vmatpush1.msra.mxu0 %v394
        %524 = vmatprep.subr.mxu0 %v410
        %525 = vmatpush1.msra.mxu0 %v409
        %526 = vmatprep.subr.mxu0 %v425
        %527 = vmatpush1.msra.mxu0 %v424
        %528 = vmatprep.subr.mxu0 %v440
        %529 = vmatpush1.msra.mxu0 %v439
        %530 = vmatprep.subr.mxu0 %v455
        %531 = vmatpush1.msra.mxu0 %v454
        %532 = vmatprep.subr.mxu0 %v470
        %533 = vmatpush1.msra.mxu0 %v469
        %534 = vmatprep.subr.mxu0 %v485
        %535 = vmatpush1.msra.mxu0 %v484
        %536 = vmatprep.subr.mxu0 %v500
        %537 = vmatpush1.msra.mxu0 %v499
        %538 = vmatprep.subr.mxu0 0.0
        %539 = vmatpush1.msra.mxu0 0.0
        %540 = vmatprep.subr.mxu0 0.0
        %541 = vmatpush1.msra.mxu0 0.0
        %542 = vmatprep.subr.mxu0 0.0
        %543 = vmatpush1.msra.mxu0 0.0
        %544 = vmatprep.subr.mxu0 0.0
        %545 = vmatpush1.msra.mxu0 0.0
        %546 = vmatprep.subr.mxu0 0.0
        %547 = vmatpush1.msra.mxu0 0.0
        %548 = vmatprep.subr.mxu0 0.0
        %549 = vmatpush1.msra.mxu0 0.0
        %550 = vmatprep.subr.mxu0 0.0
        %551 = vmatpush1.msra.mxu0 0.0
        %552 = vmatprep.subr.mxu0 0.0
        %553 = vmatpush1.msra.mxu0 0.0
        %554 = vmatprep.subr.mxu0 0.0
        %555 = vmatpush1.msra.mxu0 0.0
        %556 = vmatprep.subr.mxu0 0.0
        %557 = vmatpush1.msra.mxu0 0.0
        %558 = vmatprep.subr.mxu0 0.0
        %559 = vmatpush1.msra.mxu0 0.0
        %560 = vmatprep.subr.mxu0 0.0
        %561 = vmatpush1.msra.mxu0 0.0
        %562 = vmatprep.subr.mxu0 0.0
        %563 = vmatpush1.msra.mxu0 0.0
        %564 = vmatprep.subr.mxu0 0.0
        %565 = vmatpush1.msra.mxu0 0.0
        %566 = vmatprep.subr.mxu0 0.0
        %567 = vmatpush1.msra.mxu0 0.0
        %568 = vmatprep.subr.mxu0 0.0
        %569 = vmatpush1.msra.mxu0 0.0
        %570 = vmatprep.mubr.f32.mxu0 0.0
        %571 = vmatmul.mubr.f32.gmra.mrb[0].mxu0 %v505
        %v572 = vpop.f32.mrb[0].mxu0
        %v573 = vadd.f32 0.0, %v572
        %v574 = vpop.f32.mrb[0].mxu0
        %v575 = vadd.f32 0.0, %v574
        %576 = vdwg.mxu0
        %577 = vmatprep.subr.mxu0 0.0
        %578 = vmatpush1.msra.mxu0 %v274
        %579 = vmatprep.subr.mxu0 0.0
        %580 = vmatpush1.msra.mxu0 %v291
        %581 = vmatprep.subr.mxu0 0.0
        %582 = vmatpush1.msra.mxu0 %v306
        %583 = vmatprep.subr.mxu0 0.0
        %584 = vmatpush1.msra.mxu0 %v321
        %585 = vmatprep.subr.mxu0 0.0
        %586 = vmatpush1.msra.mxu0 %v336
        %587 = vmatprep.subr.mxu0 0.0
        %588 = vmatpush1.msra.mxu0 %v351
        %589 = vmatprep.subr.mxu0 0.0
        %590 = vmatpush1.msra.mxu0 %v366
        %591 = vmatprep.subr.mxu0 0.0
        %592 = vmatpush1.msra.mxu0 %v381
        %593 = vmatprep.subr.mxu0 0.0
        %594 = vmatpush1.msra.mxu0 %v396
        %595 = vmatprep.subr.mxu0 0.0
        %596 = vmatpush1.msra.mxu0 %v411
        %597 = vmatprep.subr.mxu0 0.0
        %598 = vmatpush1.msra.mxu0 %v426
        %599 = vmatprep.subr.mxu0 0.0
        %600 = vmatpush1.msra.mxu0 %v441
        %601 = vmatprep.subr.mxu0 0.0
        %602 = vmatpush1.msra.mxu0 %v456
        %603 = vmatprep.subr.mxu0 0.0
        %604 = vmatpush1.msra.mxu0 %v471
        %605 = vmatprep.subr.mxu0 0.0
        %606 = vmatpush1.msra.mxu0 %v486
        %607 = vmatprep.subr.mxu0 0.0
        %608 = vmatpush1.msra.mxu0 %v501
        %609 = vmatprep.subr.mxu0 0.0
        %610 = vmatpush1.msra.mxu0 0.0
        %611 = vmatprep.subr.mxu0 0.0
        %612 = vmatpush1.msra.mxu0 0.0
        %613 = vmatprep.subr.mxu0 0.0
        %614 = vmatpush1.msra.mxu0 0.0
        %615 = vmatprep.subr.mxu0 0.0
        %616 = vmatpush1.msra.mxu0 0.0
        %617 = vmatprep.subr.mxu0 0.0
        %618 = vmatpush1.msra.mxu0 0.0
        %619 = vmatprep.subr.mxu0 0.0
        %620 = vmatpush1.msra.mxu0 0.0
        %621 = vmatprep.subr.mxu0 0.0
        %622 = vmatpush1.msra.mxu0 0.0
        %623 = vmatprep.subr.mxu0 0.0
        %624 = vmatpush1.msra.mxu0 0.0
        %625 = vmatprep.subr.mxu0 0.0
        %626 = vmatpush1.msra.mxu0 0.0
        %627 = vmatprep.subr.mxu0 0.0
        %628 = vmatpush1.msra.mxu0 0.0
        %629 = vmatprep.subr.mxu0 0.0
        %630 = vmatpush1.msra.mxu0 0.0
        %631 = vmatprep.subr.mxu0 0.0
        %632 = vmatpush1.msra.mxu0 0.0
        %633 = vmatprep.subr.mxu0 0.0
        %634 = vmatpush1.msra.mxu0 0.0
        %635 = vmatprep.subr.mxu0 0.0
        %636 = vmatpush1.msra.mxu0 0.0
        %637 = vmatprep.subr.mxu0 0.0
        %638 = vmatpush1.msra.mxu0 0.0
        %639 = vmatprep.subr.mxu0 0.0
        %640 = vmatpush1.msra.mxu0 0.0
        %641 = vmatprep.mubr.f32.mxu0 0.0
        %642 = vmatmul.mubr.f32.gmra.mrb[0].mxu0 %v505
        %v643 = vpop.f32.mrb[0].mxu0
        %v644 = vadd.f32 0.0, %v643
        %v645 = vpop.f32.mrb[0].mxu0
        %646 = vdwg.mxu0
        %647 = vst [vmem:[%s257] sm:$0xff] %v573
        %648 = vst [vmem:[%s257 + $0x8] sm:$0xff] %v575
        %649 = vst [vmem:[%s257 + $0x10] sm:$0xff] %v644
        %v650 = vld [vmem:[%s2] sm:$0x7]
        %v652 = vlaneseq
        %v653 = vshrl.u32 %v652, 7
        %v654 = vsub.s32 0, %v653
        %v655 = vrot.slane %v650, %v654
        %v656 = vlaneseq
        %v657 = vshrl.u32 %v656, 7
        %v658 = vsub.s32 1, %v657
        %v659 = vrot.slane %v650, %v658
        %v660 = vlaneseq
        %v661 = vshrl.u32 %v660, 7
        %v662 = vsub.s32 2, %v661
        %v663 = vrot.slane %v650, %v662
        %v667 = vmul.f32 %v573, %v655
        %v668 = vmul.f32 %v575, %v659
        %v669 = vmul.f32 %v644, %v663
        %v670 = vadd.f32 %v667, 0.0
        %v671 = vmul.f32 %v667, %v667
        %v672 = vadd.f32 %v671, 0.0
        %v673 = vadd.f32 %v670, %v668
        %v674 = vmul.f32 %v668, %v668
        %v675 = vadd.f32 %v672, %v674
        %v676 = vadd.f32 %v673, %v669
        %v677 = vmul.f32 %v669, %v669
        %v678 = vadd.f32 %v675, %v677
        %679 = vst [vmem:[%s264] sm:$0xff] %v676
        %680 = vst [vmem:[%s271] sm:$0xff] %v678
        %s681 = sand.u32 %s103, 1
        %s682 = scalar_lea.sflag [#allocation4], %s681
        %s683 = sand.u32 %s103, 1
        %s684 = smul.addr %s683, 24
        %s685 = scalar_lea.vmem [#allocation7], %s684
        %s686 = sand.u32 %s27, 1
        %s687 = scalar_lea.sflag [#allocation9], %s686
        %s688 = sand.u32 %s129, 1
        %s689 = smul.addr %s688, 8
        %s690 = scalar_lea.vmem [#allocation8], %s689
        %s691 = sand.u32 %s27, 1
        %s692 = scalar_lea.sflag [#allocation9], %s691
        %s693 = sand.u32 %s155, 1
        %s694 = smul.addr %s693, 8
        %s695 = scalar_lea.vmem [#allocation10], %s694
        // Predicated region
        $region41: #{tpu_custom_call.1} parent=31 // pred_check
          %p696 = pneg %p113
        $region42: #{tpu_custom_call.1} parent=31 // pred_check_branch
          %698 = sbr.rel (%p696) target = $region44
        $region43: #{tpu_custom_call.1} parent=31 // pred_region
          %s700 = ssub.s32 384, 384
          %701 = vsyncadd %s682, %s700
          %s702 = smul.addr %s27, 3
          %s703 = smul.addr %s702, 128
          %s704 = scalar_lea.hbm %s3, %s703
          %s706 = sshll.u32 %s685, 4
          %s707 = int_to_ptr.vmem [resolvable:$true] %s706
          %709 = dma.vmem_to_hbm [thread:$0]  %s707, 384, %s704, %s682
        $region44: #{tpu_custom_call.1} parent=31 // pred_fallthru
          _
        // Predicated region
        $region45: #{tpu_custom_call.1} parent=31 // pred_check
          %p710 = pneg %p139
        $region46: #{tpu_custom_call.1} parent=31 // pred_check_branch
          %712 = sbr.rel (%p710) target = $region48
        $region47: #{tpu_custom_call.1} parent=31 // pred_region
          %s714 = ssub.s32 128, 128
          %715 = vsyncadd %s687, %s714
          %s716 = smul.addr %s27, 128
          %s717 = scalar_lea.hbm %s4, %s716
          %s719 = sshll.u32 %s690, 4
          %s720 = int_to_ptr.vmem [resolvable:$true] %s719
          %722 = dma.vmem_to_hbm [thread:$0]  %s720, 128, %s717, %s687
        $region48: #{tpu_custom_call.1} parent=31 // pred_fallthru
          _
        // Predicated region
        $region49: #{tpu_custom_call.1} parent=31 // pred_check
          %p723 = pneg %p165
        $region50: #{tpu_custom_call.1} parent=31 // pred_check_branch
          %725 = sbr.rel (%p723) target = $region52
        $region51: #{tpu_custom_call.1} parent=31 // pred_region
          %s727 = ssub.s32 128, 128
          %728 = vsyncadd %s692, %s727
          %s729 = smul.addr %s27, 128
          %s730 = scalar_lea.hbm %s5, %s729
          %s732 = sshll.u32 %s695, 4
          %s733 = int_to_ptr.vmem [resolvable:$true] %s732
          %735 = dma.vmem_to_hbm [thread:$0]  %s733, 128, %s730, %s692
        $region52: #{tpu_custom_call.1} parent=31 // pred_fallthru
          _
      $region32: #{tpu_custom_call.1} parent=5 // pred_fallthru
        _
      %p736 = scmp.le.s32.totalorder 2, %s22
      // Predicated region
      $region53: #{tpu_custom_call.1} parent=5 // pred_check
        %p737 = pneg %p736
      $region54: #{tpu_custom_call.1} parent=5 // pred_check_branch
        %739 = sbr.rel (%p737) target = $region56
      $region55: #{tpu_custom_call.1} parent=5 // pred_region
        %s740 = ssub.s32 %s22, 2
        // Predicated region
        $region57: #{tpu_custom_call.1} parent=55 // pred_check
          %p741 = pneg %p119
        $region58: #{tpu_custom_call.1} parent=55 // pred_check_branch
          %743 = sbr.rel (%p741) target = $region60
        $region59: #{tpu_custom_call.1} parent=55 // pred_region
          %s744 = sand.u32 %s104, 1
          %s745 = scalar_lea.sflag [#allocation4], %s744
          %s746 = sand.u32 %s104, 1
          %s747 = smul.addr %s746, 24
          %s748 = scalar_lea.vmem [#allocation7], %s747
          %749 = dma.done %s745, 384
        $region60: #{tpu_custom_call.1} parent=55 // pred_fallthru
          _
        // Predicated region
        $region61: #{tpu_custom_call.1} parent=55 // pred_check
          %p750 = pneg %p145
        $region62: #{tpu_custom_call.1} parent=55 // pred_check_branch
          %752 = sbr.rel (%p750) target = $region64
        $region63: #{tpu_custom_call.1} parent=55 // pred_region
          %s753 = sand.u32 %s28, 1
          %s754 = scalar_lea.sflag [#allocation9], %s753
          %s755 = sand.u32 %s130, 1
          %s756 = smul.addr %s755, 8
          %s757 = scalar_lea.vmem [#allocation8], %s756
          %758 = dma.done %s754, 128
        $region64: #{tpu_custom_call.1} parent=55 // pred_fallthru
          _
        // Predicated region
        $region65: #{tpu_custom_call.1} parent=55 // pred_check
          %p759 = pneg %p171
        $region66: #{tpu_custom_call.1} parent=55 // pred_check_branch
          %761 = sbr.rel (%p759) target = $region68
        $region67: #{tpu_custom_call.1} parent=55 // pred_region
          %s762 = sand.u32 %s28, 1
          %s763 = scalar_lea.sflag [#allocation9], %s762
          %s764 = sand.u32 %s156, 1
          %s765 = smul.addr %s764, 8
          %s766 = scalar_lea.vmem [#allocation10], %s765
          %767 = dma.done %s763, 128
        $region68: #{tpu_custom_call.1} parent=55 // pred_fallthru
          _
      $region56: #{tpu_custom_call.1} parent=5 // pred_fallthru
        _
    $region6: #{tpu_custom_call.1} parent=1 // loop_footer
      %s26 = sadd.s32 1, %s22
    $region7: #{tpu_custom_call.1} parent=1 // loop_footer_branch
      %21 = sbr.rel target = $region3
    $region8: #{tpu_custom_call.1} parent=1 // loop_exit
      _
    %768 = vsyncpa [#allocation3], 1
    %s769 = scalar_lea.sflag [#allocation3], 1
    %770 = vsyncpa %s769, 1
    %771 = vsyncpa [#allocation6], 1
    %772 = vsyncpa [#allocation4], 1
    %s773 = scalar_lea.sflag [#allocation4], 1
    %774 = vsyncpa %s773, 1
    %775 = vsyncpa [#allocation9], 1
    %s776 = scalar_lea.sflag [#allocation9], 1
    %777 = vsyncpa %s776, 1

</llo_original>
